<compile_context>
chip_gen: v7x
topology: tpu7x:2x2x1
jax: 0.10.0
libtpu: 0.0.40
codegen_flags: <defaults>
</compile_context>

<pallas_src>
import functools
import numpy as np

import jax
import jax.numpy as jnp
from jax.experimental import pallas as pl
from jax.experimental.pallas import tpu as pltpu


# ----------------------------- configuration -------------------------------
TEMPERATURE = 0.1
BASE_TEMPERATURE = 0.07
LOSS_WEIGHT = 0.1
MAX_SAMPLES = 64
IGNORE_INDEX = -1
NCORES = 2            # grid sharded across TensorCores on v7x; harmless elsewhere
MAX_TILE = 1024       # pixels per CE tile (lane axis), multiple of 128


# =============================== CE kernel =================================
def _ce_kernel(logits_ref, tgt_ref, sum_ref, cnt_ref, sum_acc, cnt_acc,
               *, ignore_index, hw, npc, tile):
    """logits_ref: (B, C, TILE) f32, tgt_ref: (B, TILE) int32.
    Accumulates per-(batch, lane) partial CE sums / valid counts in VMEM scratch
    and reduces once in the epilogue into per-core (1,1,128) outputs."""
    j = pl.program_id(1)

    @pl.when(j == 0)
    def _():
        sum_acc[...] = jnp.zeros_like(sum_acc)
        cnt_acc[...] = jnp.zeros_like(cnt_acc)

    l = logits_ref[...].astype(jnp.float32)              # (B, C, TILE)
    t = tgt_ref[...]                                     # (B, TILE) int32

    m = jnp.max(l, axis=1)                               # (B, TILE)
    lse = m + jnp.log(jnp.sum(jnp.exp(l - m[:, None, :]), axis=1))

    cls = jax.lax.broadcasted_iota(jnp.int32, l.shape, 1)            # class idx
    picked = jnp.sum(jnp.where(cls == t[:, None, :], l, 0.0), axis=1)

    # Tail / out-of-range masking (no host-side padding of the logits).
    raw_tile = pl.program_id(0) * npc + j
    lane = jax.lax.broadcasted_iota(jnp.int32, t.shape, 1)
    in_bounds = (raw_tile * tile + lane) < hw
    valid = (t != ignore_index) & in_bounds

    sum_acc[...] += jnp.where(valid, lse - picked, 0.0)
    cnt_acc[...] += valid.astype(jnp.float32)

    @pl.when(j == npc - 1)
    def _():
        sum_ref[...] = jnp.full(sum_ref.shape, jnp.sum(sum_acc[...]), jnp.float32)
        cnt_ref[...] = jnp.full(cnt_ref.shape, jnp.sum(cnt_acc[...]), jnp.float32)


def cross_entropy_loss(pred_logits, target, ignore_index=IGNORE_INDEX):
    """pred_logits: (B, C, H, W) f32, target: (B, H, W) int. Mean CE over valid pixels."""
    B, C, H, W = pred_logits.shape
    HW = H * W
    logits = pred_logits.reshape(B, C, HW)               # free reshape, no transpose
    tgt = target.reshape(B, HW).astype(jnp.int32)        # lane-dense targets

    TILE = min(MAX_TILE, ((HW + 127) // 128) * 128)
    n_tiles = pl.cdiv(HW, TILE)
    npc = pl.cdiv(n_tiles, NCORES)                       # tiles per core

    kernel = functools.partial(_ce_kernel, ignore_index=ignore_index,
                               hw=HW, npc=npc, tile=TILE)

    # Clamp the block index for the (fully masked) overhang iterations of the
    # second core so no block origin falls outside the array.
    def pix(c, j):
        return jnp.minimum(c * npc + j, n_tiles - 1)

    out_sum, out_cnt = pl.pallas_call(
        kernel,
        out_shape=(jax.ShapeDtypeStruct((NCORES, 1, 128), jnp.float32),
                   jax.ShapeDtypeStruct((NCORES, 1, 128), jnp.float32)),
        grid=(NCORES, npc),
        in_specs=[pl.BlockSpec((B, C, TILE), lambda c, j: (0, 0, pix(c, j))),
                  pl.BlockSpec((B, TILE), lambda c, j: (0, pix(c, j)))],
        out_specs=(pl.BlockSpec((1, 1, 128), lambda c, j: (c, 0, 0)),
                   pl.BlockSpec((1, 1, 128), lambda c, j: (c, 0, 0))),
        scratch_shapes=[pltpu.VMEM((B, TILE), jnp.float32),
                        pltpu.VMEM((B, TILE), jnp.float32)],
        compiler_params=pltpu.CompilerParams(
            dimension_semantics=("parallel", "arbitrary")),
    )(logits, tgt)

    loss_sum = jnp.sum(out_sum[:, 0, 0])
    valid_cnt = jnp.sum(out_cnt[:, 0, 0])
    return loss_sum / jnp.maximum(valid_cnt, 1.0)


# =========================== contrastive kernel ============================
def _contrastive_kernel(feat_ref, labc_ref, labr_ref, out_ref, *,
                        temperature, base_temperature):
    f = feat_ref[...].astype(jnp.float32)                 # (M, Dp), Dp lane-padded
    lab_c = labc_ref[...]                                 # (M, 1) f32
    lab_r = labr_ref[...]                                 # (1, M) f32
    M = f.shape[0]

    # anchor_dot_contrast = (F @ F^T) / temperature  (zero-padded lanes are inert)
    a = jax.lax.dot_general(f, f, (((1,), (1,)), ((), ())),
                            preferred_element_type=jnp.float32) * (1.0 / temperature)
    logits = a - jnp.max(a, axis=1, keepdims=True)

    same = (lab_c == lab_r).astype(jnp.float32)           # (M, M)
    neg_mask = 1.0 - same
    row = jax.lax.broadcasted_iota(jnp.int32, (M, M), 0)
    col = jax.lax.broadcasted_iota(jnp.int32, (M, M), 1)
    pos_mask = same * jnp.where(row == col, 0.0, 1.0)     # zero diagonal

    exp_logits = jnp.exp(logits)
    neg_sum = jnp.sum(exp_logits * neg_mask, axis=1, keepdims=True)
    log_prob = logits - jnp.log(exp_logits + neg_sum)

    mean_log_prob_pos = (jnp.sum(pos_mask * log_prob, axis=1, keepdims=True) /
                         jnp.sum(pos_mask, axis=1, keepdims=True))
    loss = -(temperature / base_temperature) * mean_log_prob_pos
    out_ref[...] = jnp.full(out_ref.shape, jnp.mean(loss), jnp.float32)


def contrastive_loss(features_, labels_, temperature=TEMPERATURE,
                     base_temperature=BASE_TEMPERATURE):
    """features_: (T, n_view, D) f32, labels_: (T,) f32."""
    T, n_view, D = features_.shape
    M = T * n_view
    # torch.cat(torch.unbind(features_, dim=1), dim=0)
    contrast_feature = jnp.transpose(features_, (1, 0, 2)).reshape(M, D)
    Dp = ((D + 127) // 128) * 128                         # pad to full lane width
    if Dp != D:
        contrast_feature = jnp.pad(contrast_feature, ((0, 0), (0, Dp - D)))

    lab = jnp.tile(labels_.astype(jnp.float32), n_view)
    lab_col = lab.reshape(M, 1)
    lab_row = lab.reshape(1, M)

    kernel = functools.partial(_contrastive_kernel, temperature=temperature,
                               base_temperature=base_temperature)
    out = pl.pallas_call(
        kernel,
        out_shape=jax.ShapeDtypeStruct((1, 128), jnp.float32),
        grid=(1,),
        in_specs=[pl.BlockSpec((M, Dp), lambda i: (0, 0)),
                  pl.BlockSpec((M, 1), lambda i: (0, 0)),
                  pl.BlockSpec((1, M), lambda i: (0, 0))],
        out_specs=pl.BlockSpec((1, 128), lambda i: (0, 0)),
    )(contrast_feature, lab_col, lab_row)
    return out[0, 0]


# ================================ glue ====================================
def _interp_matrix_align_corners(out_size, in_size):
    """Dense (out_size, in_size) 1-D bilinear interpolation matrix, align_corners=True."""
    if out_size == 1:
        pos = jnp.zeros((1,), jnp.float32)
    else:
        pos = jnp.arange(out_size, dtype=jnp.float32) * ((in_size - 1) / (out_size - 1))
    lo = jnp.floor(pos).astype(jnp.int32)
    hi = jnp.minimum(lo + 1, in_size - 1)
    frac = pos - lo.astype(jnp.float32)
    src = jnp.arange(in_size, dtype=jnp.int32)[None, :]
    return ((src == lo[:, None]).astype(jnp.float32) * (1.0 - frac[:, None]) +
            (src == hi[:, None]).astype(jnp.float32) * frac[:, None])


def bilinear_upsample_align_corners(x, out_h, out_w):
    """x: (B, C, H, W) -> (B, C, out_h, out_w) as two interpolation matmuls (MXU)."""
    wy = _interp_matrix_align_corners(out_h, x.shape[2])
    wx = _interp_matrix_align_corners(out_w, x.shape[3])
    return jnp.einsum('oh,bchw,pw->bcop', wy, x.astype(jnp.float32), wx,
                      precision=jax.lax.Precision.HIGHEST)


def nearest_resize_labels(lab, out_h, out_w):
    """lab: (B, H, W) -> (B, out_h, out_w), torch 'nearest' semantics."""
    B, H, W = lab.shape
    yi = (jnp.arange(out_h) * H) // out_h
    xi = (jnp.arange(out_w) * W) // out_w
    return lab[:, yi][:, :, xi]


def hard_anchor_sampling_np(X, gt, max_samples, ignore_label=IGNORE_INDEX):
    """Host-side deterministic stand-in for _hard_anchor_sampling.
    X: (B, N, D) np.float32, gt: (B, N) np.int32."""
    # TODO(synk): torch.randperm selection replaced by deterministic first-K;
    #             global pos_list/neg_list memory bank (add_samples) not replicated.
    batch_size, _, feat_dim = X.shape
    classes, total_classes = [], 0
    for ii in range(batch_size):
        uniq = np.unique(gt[ii])
        classes.append([int(c) for c in uniq if c != ignore_label])
        total_classes += len(uniq)            # reference counts unfiltered uniques
    if total_classes == 0:
        return None, None
    n_view = max_samples // total_classes
    if n_view == 0:
        return None, None
    easy_view = n_view // 2
    hard_view = n_view - easy_view
    X_ = np.zeros((total_classes, n_view, feat_dim), np.float32)
    y_ = np.zeros((total_classes,), np.float32)
    ptr = 0
    for ii in range(batch_size):
        this_gt = gt[ii]
        for cls_id in classes[ii]:
            hard_idx = np.nonzero(this_gt != cls_id)[0]
            easy_idx = np.nonzero(this_gt == cls_id)[0]
            nh, ne = len(hard_idx), len(easy_idx)
            if nh > 0:
                hard_sel = (np.tile(hard_idx, hard_view // nh)
                            if nh < hard_view else hard_idx[:hard_view])
            else:
                hard_sel = np.zeros((0,), np.int64)
            if ne > 0:
                easy_sel = (np.tile(easy_idx, easy_view // ne)
                            if ne < easy_view else easy_idx[:easy_view])
            else:
                easy_sel = np.zeros((0,), np.int64)
            sel = np.concatenate([hard_sel, easy_sel]).astype(np.int64)
            X_[ptr, :len(sel), :] = X[ii, sel, :]
            y_[ptr] = cls_id
            ptr += 1
    return X_, y_


def contrast_ce_loss_forward(seg, embed, target, with_embed=False):
    """ContrastCELoss.forward.
    seg:   (B, C, Hs, Ws) logits
    embed: (B, D, He, We) embedding
    target:(B, H, W) int labels
    """
    B, C, Hs, Ws = seg.shape
    _, D, He, We = embed.shape
    H, W = target.shape[1], target.shape[2]

    # seg branch: align_corners bilinear via interpolation matmuls + Pallas CE.
    pred = bilinear_upsample_align_corners(seg, H, W)
    loss_seg = cross_entropy_loss(pred, target)      # dispatched asynchronously

    if not with_embed:
        # Reference returns `loss + 0 * loss_contrast`; skip the whole contrast
        # branch (host sync + kernels) since the weighted term is zero.
        return loss_seg

    # contrast branch (predict = argmax(seg) is passed to the sampler in the
    # reference but never used by it, so we do not compute it here).
    labels_small = nearest_resize_labels(target, He, We)             # (B, He, We)
    feats = jnp.transpose(embed, (0, 2, 3, 1)).reshape(B, -1, D)     # (B, He*We, D)
    # Host sync for the data-dependent sampler; the CE kernel already overlaps it.
    labels_np = np.asarray(labels_small.reshape(B, -1), np.int32)
    feats_np = np.asarray(feats, np.float32)

    X_, y_ = hard_anchor_sampling_np(feats_np, labels_np, MAX_SAMPLES)
    if X_ is None:
        loss_contrast = jnp.float32(0.0)
    else:
        loss_contrast = contrastive_loss(jnp.asarray(X_), jnp.asarray(y_))

    return loss_seg + LOSS_WEIGHT * loss_contrast


# ================================ main =====================================
if __name__ == "__main__":
    key = jax.random.PRNGKey(0)
    k1, k2, k3 = jax.random.split(key, 3)

    B, C, D = 2, 4, 32          # batch, num seg classes, embedding dim
    H = W = 16                  # target (label) spatial size
    Hs = Ws = 8                 # seg / embedding spatial size

    seg = jax.random.normal(k1, (B, C, Hs, Ws), dtype=jnp.float32)
    embed = jax.random.normal(k2, (B, D, Hs, Ws), dtype=jnp.float32)
    # Pixel-contrast embeddings come from an L2-normalized projection head;
    # unnormalized random features push exp((f.f)/T) out of f32 range.
    embed = embed / jnp.linalg.norm(embed, axis=1, keepdims=True)
    target = jax.random.randint(k3, (B, H, W), 0, C, dtype=jnp.int32)

    loss_full = contrast_ce_loss_forward(seg, embed, target, with_embed=True)
    loss_seg_only = contrast_ce_loss_forward(seg, embed, target, with_embed=False)
    loss_full, loss_seg_only = jax.block_until_ready((loss_full, loss_seg_only))

    assert np.isfinite(float(loss_full)), float(loss_full)
    assert np.isfinite(float(loss_seg_only)), float(loss_seg_only)
    print("KERNEL_OK")
</pallas_src>

<mosaic_0001>
module attributes {stable_mosaic.version = 11 : i64} {
  func.func @_ce_kernel(%arg0: i32, %arg1: i32, %arg2: memref<2x4x256xf32, #tpu.memory_space<vmem>>, %arg3: memref<2x256xi32, #tpu.memory_space<vmem>>, %arg4: memref<1x1x128xf32, #tpu.memory_space<vmem>>, %arg5: memref<1x1x128xf32, #tpu.memory_space<vmem>>, %arg6: memref<2x256xf32, #tpu.memory_space<vmem>>, %arg7: memref<2x256xf32, #tpu.memory_space<vmem>>) attributes {dimension_semantics = [#tpu.dimension_semantics<parallel>, #tpu.dimension_semantics<arbitrary>], iteration_bounds = array<i64: 2, 1>, scalar_prefetch = 0 : i64, scratch_operands = 2 : i64, tpu.core_type = #tpu.core_type<tc>, window_params = [{transform_indices = @transform_0, window_bounds = array<i64: 2, 4, 256>}, {transform_indices = @transform_1, window_bounds = array<i64: 2, 256>}, {transform_indices = @transform_2, window_bounds = array<i64: 1, 1, 128>}, {transform_indices = @transform_3, window_bounds = array<i64: 1, 1, 128>}]} {
    %c0_i32 = arith.constant 0 : i32
    %0 = arith.cmpi eq, %arg1, %c0_i32 : i32
    %1 = arith.extui %0 : i1 to i32
    %c0_i32_0 = arith.constant 0 : i32
    %2 = arith.cmpi ne, %1, %c0_i32_0 : i32
    scf.if %2 {
      %cst_20 = arith.constant 0.000000e+00 : f32
      %45 = vector.broadcast %cst_20 : f32 to vector<2x256xf32>
      %c0_21 = arith.constant 0 : index
      %c0_22 = arith.constant 0 : index
      %46 = vector.load %arg6[%c0_21, %c0_22] : memref<2x256xf32, #tpu.memory_space<vmem>>, vector<2x256xf32>
      tpu.vector_store %arg6[%c0_21, %c0_22], %45 {strides = array<i32>} : memref<2x256xf32, #tpu.memory_space<vmem>>, vector<2x256xf32>,
      %cst_23 = arith.constant 0.000000e+00 : f32
      %47 = vector.broadcast %cst_23 : f32 to vector<2x256xf32>
      %c0_24 = arith.constant 0 : index
      %c0_25 = arith.constant 0 : index
      %48 = vector.load %arg7[%c0_24, %c0_25] : memref<2x256xf32, #tpu.memory_space<vmem>>, vector<2x256xf32>
      tpu.vector_store %arg7[%c0_24, %c0_25], %47 {strides = array<i32>} : memref<2x256xf32, #tpu.memory_space<vmem>>, vector<2x256xf32>,
    } else {
    }
    %c0 = arith.constant 0 : index
    %c0_1 = arith.constant 0 : index
    %c0_2 = arith.constant 0 : index
    %3 = vector.load %arg2[%c0, %c0_1, %c0_2] : memref<2x4x256xf32, #tpu.memory_space<vmem>>, vector<2x4x256xf32>
    %c0_3 = arith.constant 0 : index
    %c0_4 = arith.constant 0 : index
    %4 = vector.load %arg3[%c0_3, %c0_4] : memref<2x256xi32, #tpu.memory_space<vmem>>, vector<2x256xi32>
    %cst = arith.constant dense<0xFF800000> : vector<2x256xf32>
    %5 = vector.multi_reduction <maximumf>, %3, %cst [1] : vector<2x4x256xf32> to vector<2x256xf32>
    %6 = vector.shape_cast %5 : vector<2x256xf32> to vector<2x1x256xf32>
    %7 = vector.broadcast %6 : vector<2x1x256xf32> to vector<2x4x256xf32>
    %8 = arith.subf %3, %7 : vector<2x4x256xf32>
    %9 = math.exp %8 : vector<2x4x256xf32>
    %cst_5 = arith.constant dense<0.000000e+00> : vector<2x256xf32>
    %10 = vector.multi_reduction <add>, %9, %cst_5 [1] : vector<2x4x256xf32> to vector<2x256xf32>
    %11 = math.log %10 : vector<2x256xf32>
    %12 = arith.addf %5, %11 : vector<2x256xf32>
    %13 = tpu.iota {dimensions = array<i32: 1>} : vector<2x4x256xi32>
    %14 = vector.shape_cast %4 : vector<2x256xi32> to vector<2x1x256xi32>
    %15 = vector.broadcast %14 : vector<2x1x256xi32> to vector<2x4x256xi32>
    %16 = arith.cmpi eq, %13, %15 : vector<2x4x256xi32>
    %cst_6 = arith.constant 0.000000e+00 : f32
    %17 = vector.broadcast %cst_6 : f32 to vector<2x4x256xf32>
    %18 = arith.select %16, %3, %17 : vector<2x4x256xi1>, vector<2x4x256xf32>
    %cst_7 = arith.constant dense<0.000000e+00> : vector<2x256xf32>
    %19 = vector.multi_reduction <add>, %18, %cst_7 [1] : vector<2x4x256xf32> to vector<2x256xf32>
    %c1_i32 = arith.constant 1 : i32
    %20 = arith.muli %arg0, %c1_i32 : i32
    %21 = arith.addi %20, %arg1 : i32
    %22 = tpu.iota {dimensions = array<i32: 1>} : vector<2x256xi32>
    %c256_i32 = arith.constant 256 : i32
    %23 = arith.muli %21, %c256_i32 : i32
    %24 = vector.broadcast %23 : i32 to vector<2x256xi32>
    %25 = arith.addi %24, %22 : vector<2x256xi32>
    %c256_i32_8 = arith.constant 256 : i32
    %26 = vector.broadcast %c256_i32_8 : i32 to vector<2x256xi32>
    %27 = arith.cmpi slt, %25, %26 : vector<2x256xi32>
    %c-1_i32 = arith.constant -1 : i32
    %28 = vector.broadcast %c-1_i32 : i32 to vector<2x256xi32>
    %29 = arith.cmpi ne, %4, %28 : vector<2x256xi32>
    %30 = arith.andi %29, %27 : vector<2x256xi1>
    %c0_9 = arith.constant 0 : index
    %c0_10 = arith.constant 0 : index
    %31 = vector.load %arg6[%c0_9, %c0_10] : memref<2x256xf32, #tpu.memory_space<vmem>>, vector<2x256xf32>
    %32 = arith.subf %12, %19 : vector<2x256xf32>
    %cst_11 = arith.constant 0.000000e+00 : f32
    %33 = vector.broadcast %cst_11 : f32 to vector<2x256xf32>
    %34 = arith.select %30, %32, %33 : vector<2x256xi1>, vector<2x256xf32>
    %35 = arith.addf %31, %34 : vector<2x256xf32>
    %c0_12 = arith.constant 0 : index
    %c0_13 = arith.constant 0 : index
    %36 = vector.load %arg6[%c0_12, %c0_13] : memref<2x256xf32, #tpu.memory_space<vmem>>, vector<2x256xf32>
    tpu.vector_store %arg6[%c0_12, %c0_13], %35 {strides = array<i32>} : memref<2x256xf32, #tpu.memory_space<vmem>>, vector<2x256xf32>,
    %c0_14 = arith.constant 0 : index
    %c0_15 = arith.constant 0 : index
    %37 = vector.load %arg7[%c0_14, %c0_15] : memref<2x256xf32, #tpu.memory_space<vmem>>, vector<2x256xf32>
    %38 = arith.extui %30 : vector<2x256xi1> to vector<2x256xi32>
    %39 = arith.sitofp %38 : vector<2x256xi32> to vector<2x256xf32>
    %40 = arith.addf %37, %39 : vector<2x256xf32>
    %c0_16 = arith.constant 0 : index
    %c0_17 = arith.constant 0 : index
    %41 = vector.load %arg7[%c0_16, %c0_17] : memref<2x256xf32, #tpu.memory_space<vmem>>, vector<2x256xf32>
    tpu.vector_store %arg7[%c0_16, %c0_17], %40 {strides = array<i32>} : memref<2x256xf32, #tpu.memory_space<vmem>>, vector<2x256xf32>,
    %c0_i32_18 = arith.constant 0 : i32
    %42 = arith.cmpi eq, %arg1, %c0_i32_18 : i32
    %43 = arith.extui %42 : i1 to i32
    %c0_i32_19 = arith.constant 0 : i32
    %44 = arith.cmpi ne, %43, %c0_i32_19 : i32
    scf.if %44 {
      %c0_20 = arith.constant 0 : index
      %c0_21 = arith.constant 0 : index
      %45 = vector.load %arg6[%c0_20, %c0_21] : memref<2x256xf32, #tpu.memory_space<vmem>>, vector<2x256xf32>
      %46 = vector.shape_cast %45 : vector<2x256xf32> to vector<1x2x256xf32>
      %cst_22 = arith.constant dense<0.000000e+00> : vector<1xf32>
      %47 = vector.multi_reduction <add>, %46, %cst_22 [1, 2] : vector<1x2x256xf32> to vector<1xf32>
      %48 = vector.shape_cast %47 : vector<1xf32> to vector<1x1x1xf32>
      %49 = vector.extract %48[0, 0, 0] : f32 from vector<1x1x1xf32>
      %50 = vector.broadcast %49 : f32 to vector<1x1x128xf32>
      %c0_23 = arith.constant 0 : index
      %c0_24 = arith.constant 0 : index
      %c0_25 = arith.constant 0 : index
      %51 = vector.load %arg4[%c0_23, %c0_24, %c0_25] : memref<1x1x128xf32, #tpu.memory_space<vmem>>, vector<1x1x128xf32>
      tpu.vector_store %arg4[%c0_23, %c0_24, %c0_25], %50 {strides = array<i32>} : memref<1x1x128xf32, #tpu.memory_space<vmem>>, vector<1x1x128xf32>,
      %c0_26 = arith.constant 0 : index
      %c0_27 = arith.constant 0 : index
      %52 = vector.load %arg7[%c0_26, %c0_27] : memref<2x256xf32, #tpu.memory_space<vmem>>, vector<2x256xf32>
      %53 = vector.shape_cast %52 : vector<2x256xf32> to vector<1x2x256xf32>
      %cst_28 = arith.constant dense<0.000000e+00> : vector<1xf32>
      %54 = vector.multi_reduction <add>, %53, %cst_28 [1, 2] : vector<1x2x256xf32> to vector<1xf32>
      %55 = vector.shape_cast %54 : vector<1xf32> to vector<1x1x1xf32>
      %56 = vector.extract %55[0, 0, 0] : f32 from vector<1x1x1xf32>
      %57 = vector.broadcast %56 : f32 to vector<1x1x128xf32>
      %c0_29 = arith.constant 0 : index
      %c0_30 = arith.constant 0 : index
      %c0_31 = arith.constant 0 : index
      %58 = vector.load %arg5[%c0_29, %c0_30, %c0_31] : memref<1x1x128xf32, #tpu.memory_space<vmem>>, vector<1x1x128xf32>
      tpu.vector_store %arg5[%c0_29, %c0_30, %c0_31], %57 {strides = array<i32>} : memref<1x1x128xf32, #tpu.memory_space<vmem>>, vector<1x1x128xf32>,
    } else {
    }
    return
  }
  func.func @transform_0(%arg0: i32, %arg1: i32) -> (i32, i32, i32) {
    %c1_i32 = arith.constant 1 : i32
    %0 = arith.muli %arg0, %c1_i32 : i32
    %1 = arith.addi %0, %arg1 : i32
    %c0_i32 = arith.constant 0 : i32
    %2 = arith.minsi %1, %c0_i32 : i32
    %c0_i32_0 = arith.constant 0 : i32
    %c0_i32_1 = arith.constant 0 : i32
    %c0_i32_2 = arith.constant 0 : i32
    return %c0_i32_0, %c0_i32_1, %2 : i32, i32, i32
  }
  func.func @transform_1(%arg0: i32, %arg1: i32) -> (i32, i32) {
    %c1_i32 = arith.constant 1 : i32
    %0 = arith.muli %arg0, %c1_i32 : i32
    %1 = arith.addi %0, %arg1 : i32
    %c0_i32 = arith.constant 0 : i32
    %2 = arith.minsi %1, %c0_i32 : i32
    %c0_i32_0 = arith.constant 0 : i32
    %c0_i32_1 = arith.constant 0 : i32
    return %c0_i32_0, %2 : i32, i32
  }
  func.func @transform_2(%arg0: i32, %arg1: i32) -> (i32, i32, i32) {
    %c0_i32 = arith.constant 0 : i32
    %c0_i32_0 = arith.constant 0 : i32
    %c0_i32_1 = arith.constant 0 : i32
    return %arg0, %c0_i32, %c0_i32_0 : i32, i32, i32
  }
  func.func @transform_3(%arg0: i32, %arg1: i32) -> (i32, i32, i32) {
    %c0_i32 = arith.constant 0 : i32
    %c0_i32_0 = arith.constant 0 : i32
    %c0_i32_1 = arith.constant 0 : i32
    return %arg0, %c0_i32, %c0_i32_0 : i32, i32, i32
  }
}

</mosaic_0001>

<llo_original>
// kernel: tpu_custom_call.1
$region0: #{tpu_custom_call.1}
  #allocation0 [shape = 'u32[]', space=smem, size = 0x4, offset = 0x4, fixed_abs, tag = 'smem constant byte address 0x4 - core index']
  #allocation1 [shape = 'u32[144,128]{1,0:T(1,128)}', space=vmem, size = 0x12000, scoped, tag = 'internal scratch']
  #allocation2 [shape = 'f32[2,256]{1,0:T(2,128)}', space=vmem, size = 0x800, scoped, tag = 'scratch operand']
  #allocation3 [shape = 'f32[2,256]{1,0:T(2,128)}', space=vmem, size = 0x800, scoped, tag = 'scratch operand']
  %s0 = inlined_call_operand.hbm [shape: f32[2,4,256], index: 0, kind: input, shape index: {}]
  %s1 = inlined_call_operand.hbm [shape: s32[2,256], index: 1, kind: input, shape index: {}]
  %s2 = inlined_call_operand.hbm [shape: f32[2,1,128], index: 2, kind: output, shape index: {0}]
  %s3 = inlined_call_operand.hbm [shape: f32[2,1,128], index: 3, kind: output, shape index: {1}]
  %4 = xla_tuple %s2, %s3
  %s5 = sld [smem:[#allocation0]]
  $region65: #{tpu_custom_call.1} parent=0
    _
  %s7 = ssub.s32 1, %s5
  %s8 = scalar_select 0, %s7, %s5
  $region1: #{tpu_custom_call.1} parent=0
    #allocation4 [shape = 'u8[16384]{0}', space=vmem, size = 0x4000, scoped, tag = 'input window, operand 0']
    #allocation5 [shape = 's32[2]{0}', space=sflag, size = 0x8, scoped, tag = 'scoped memory for tpu_custom_call.1']
    #allocation6 [shape = 's32[2]{0}', space=sflag, size = 0x8, scoped, tag = 'scoped memory for tpu_custom_call.1']
    #allocation7 [shape = 'u8[4096]{0}', space=vmem, size = 0x1000, scoped, tag = 'input window, operand 1']
    #allocation8 [shape = 's32[2]{0}', space=sflag, size = 0x8, scoped, tag = 'scoped memory for tpu_custom_call.1']
    #allocation9 [shape = 'u8[1024]{0}', space=vmem, size = 0x400, scoped, tag = 'output window, operand 0']
    #allocation10 [shape = 'u8[1024]{0}', space=vmem, size = 0x400, scoped, tag = 'output window, operand 1']
    #allocation11 [shape = 's32[2]{0}', space=sflag, size = 0x8, scoped, tag = 'scoped memory for tpu_custom_call.1']
    %9 = vsyncpa [#allocation5], 0
    %s10 = scalar_lea.sflag [#allocation5], 1
    %11 = vsyncpa %s10, 0
    %12 = vsyncpa [#allocation8], 0
    %s13 = scalar_lea.sflag [#allocation8], 1
    %14 = vsyncpa %s13, 0
    %15 = vsyncpa [#allocation6], 0
    %s16 = scalar_lea.sflag [#allocation6], 1
    %17 = vsyncpa %s16, 0
    %18 = vsyncpa [#allocation11], 0
    %s19 = scalar_lea.sflag [#allocation11], 1
    %20 = vsyncpa %s19, 0
    loop: start=0, step=1, limit=4
    $region2: #{tpu_custom_call.1} parent=1 // loop_pre_header
      _
    $region3: #{tpu_custom_call.1} parent=1 // loop_header
      %s22 = sphi 0, %s26
      %p23 = scmp.ge.s32.totalorder %s22, 4
      %s29 = sphi 0, %s41
      %s30 = sphi 0, %s37
      %s31 = sphi 0, %s29
      %s32 = sphi 0, %s30
      %s33 = sphi 0, %s31
      %s34 = sphi 0, %s32
      %s50 = sphi 0, %s52
      %s53 = sphi 0, %s50
      %s54 = sphi 0, %s53
      %s70 = sphi 0, %s54
      %s82 = sphi 0, %s84
      %s85 = sphi 0, %s82
      %s86 = sphi 0, %s85
      %s102 = sphi 0, %s86
      %s108 = sphi 0, %s110
      %s111 = sphi 0, %s108
      %s112 = sphi 0, %s111
      %s128 = sphi 0, %s112
      %s134 = sphi 0, %s136
      %s137 = sphi 0, %s134
      %s138 = sphi 0, %s137
      %s154 = sphi 0, %s138
    $region4: #{tpu_custom_call.1} parent=1 // loop_header_branch
      %25 = sbr.rel (%p23) target = $region8
    $region5: #{tpu_custom_call.1} parent=1 // loop_body
      %s27 = ssub.s32 %s22, 1
      %s28 = ssub.s32 %s22, 2
      %s35 = sadd.s32 1, %s30
      %p36 = scmp.ge.s32.totalorder %s35, 1
      %s37 = scalar_select %p36, 0, %s35
      %s38 = sadd.s32 1, %s29
      %s39 = scalar_select %p36, %s38, %s29
      %p40 = scmp.ge.s32.totalorder %s39, 2
      %s41 = scalar_select %p40, 0, %s39
      %s42 = sadd.s32 %s29, %s30
      %p43 = scmp.lt.s32.totalorder %s42, 0
      %s44 = scalar_select %p43, %s42, 0
      %s45 = sadd.s32 %s41, %s37
      %p46 = scmp.lt.s32.totalorder %s45, 0
      %s47 = scalar_select %p46, %s45, 0
      %s48 = ssub.s32 %s44, %s47
      %p49 = scmp.eq.s32.totalorder %s48, 0
      %s51 = sadd.s32 %s50, 1
      %s52 = scalar_select %p49, %s50, %s51
      %p55 = pneg %p49
      %p56 = scmp.eq.s32.totalorder %s22, 1
      %p57 = por %p55, %p56
      %p58 = scmp.ne.s32.totalorder %s50, %s53
      %p59 = scmp.eq.s32.totalorder %s22, 0
      %p60 = por %p58, %p59
      %p61 = scmp.ne.s32.totalorder %s50, %s53
      %p62 = scmp.eq.s32.totalorder %s27, 1
      %p63 = por %p61, %p62
      %p64 = scmp.ne.s32.totalorder %s53, %s54
      %p65 = scmp.eq.s32.totalorder %s27, 0
      %p66 = por %p64, %p65
      %p67 = scmp.ne.s32.totalorder %s53, %s54
      %p68 = scmp.eq.s32.totalorder %s28, 1
      %p69 = por %p67, %p68
      %p71 = scmp.ne.s32.totalorder %s54, %s70
      %p72 = scmp.eq.s32.totalorder %s28, 0
      %p73 = por %p71, %p72
      %s74 = sadd.s32 %s29, %s30
      %p75 = scmp.lt.s32.totalorder %s74, 0
      %s76 = scalar_select %p75, %s74, 0
      %s77 = sadd.s32 %s41, %s37
      %p78 = scmp.lt.s32.totalorder %s77, 0
      %s79 = scalar_select %p78, %s77, 0
      %s80 = ssub.s32 %s76, %s79
      %p81 = scmp.eq.s32.totalorder %s80, 0
      %s83 = sadd.s32 %s82, 1
      %s84 = scalar_select %p81, %s82, %s83
      %p87 = pneg %p81
      %p88 = scmp.eq.s32.totalorder %s22, 1
      %p89 = por %p87, %p88
      %p90 = scmp.ne.s32.totalorder %s82, %s85
      %p91 = scmp.eq.s32.totalorder %s22, 0
      %p92 = por %p90, %p91
      %p93 = scmp.ne.s32.totalorder %s82, %s85
      %p94 = scmp.eq.s32.totalorder %s27, 1
      %p95 = por %p93, %p94
      %p96 = scmp.ne.s32.totalorder %s85, %s86
      %p97 = scmp.eq.s32.totalorder %s27, 0
      %p98 = por %p96, %p97
      %p99 = scmp.ne.s32.totalorder %s85, %s86
      %p100 = scmp.eq.s32.totalorder %s28, 1
      %p101 = por %p99, %p100
      %p103 = scmp.ne.s32.totalorder %s86, %s102
      %p104 = scmp.eq.s32.totalorder %s28, 0
      %p105 = por %p103, %p104
      %s106 = ssub.s32 %s29, %s41
      %p107 = scmp.eq.s32.totalorder %s106, 0
      %s109 = sadd.s32 %s108, 1
      %s110 = scalar_select %p107, %s108, %s109
      %p113 = pneg %p107
      %p114 = scmp.eq.s32.totalorder %s22, 1
      %p115 = por %p113, %p114
      %p116 = scmp.ne.s32.totalorder %s108, %s111
      %p117 = scmp.eq.s32.totalorder %s22, 0
      %p118 = por %p116, %p117
      %p119 = scmp.ne.s32.totalorder %s108, %s111
      %p120 = scmp.eq.s32.totalorder %s27, 1
      %p121 = por %p119, %p120
      %p122 = scmp.ne.s32.totalorder %s111, %s112
      %p123 = scmp.eq.s32.totalorder %s27, 0
      %p124 = por %p122, %p123
      %p125 = scmp.ne.s32.totalorder %s111, %s112
      %p126 = scmp.eq.s32.totalorder %s28, 1
      %p127 = por %p125, %p126
      %p129 = scmp.ne.s32.totalorder %s112, %s128
      %p130 = scmp.eq.s32.totalorder %s28, 0
      %p131 = por %p129, %p130
      %s132 = ssub.s32 %s29, %s41
      %p133 = scmp.eq.s32.totalorder %s132, 0
      %s135 = sadd.s32 %s134, 1
      %s136 = scalar_select %p133, %s134, %s135
      %p139 = pneg %p133
      %p140 = scmp.eq.s32.totalorder %s22, 1
      %p141 = por %p139, %p140
      %p142 = scmp.ne.s32.totalorder %s134, %s137
      %p143 = scmp.eq.s32.totalorder %s22, 0
      %p144 = por %p142, %p143
      %p145 = scmp.ne.s32.totalorder %s134, %s137
      %p146 = scmp.eq.s32.totalorder %s27, 1
      %p147 = por %p145, %p146
      %p148 = scmp.ne.s32.totalorder %s137, %s138
      %p149 = scmp.eq.s32.totalorder %s27, 0
      %p150 = por %p148, %p149
      %p151 = scmp.ne.s32.totalorder %s137, %s138
      %p152 = scmp.eq.s32.totalorder %s28, 1
      %p153 = por %p151, %p152
      %p155 = scmp.ne.s32.totalorder %s138, %s154
      %p156 = scmp.eq.s32.totalorder %s28, 0
      %p157 = por %p155, %p156
      %p158 = scmp.le.s32.totalorder 1, %s22
      %p159 = scmp.lt.s32.totalorder %s22, 3
      %p160 = pnand %p158, %p159
      %p161 = pneg %p160
      // Predicated region
      $region9: #{tpu_custom_call.1} parent=5 // pred_check
        _
      $region10: #{tpu_custom_call.1} parent=5 // pred_check_branch
        %163 = sbr.rel (%p160) target = $region12
      $region11: #{tpu_custom_call.1} parent=5 // pred_region
        %s164 = ssub.s32 %s22, 1
      $region12: #{tpu_custom_call.1} parent=5 // pred_fallthru
        _
      %p165 = scmp.lt.s32.totalorder %s22, 2
      // Predicated region
      $region13: #{tpu_custom_call.1} parent=5 // pred_check
        %p166 = pneg %p165
      $region14: #{tpu_custom_call.1} parent=5 // pred_check_branch
        %168 = sbr.rel (%p166) target = $region16
      $region15: #{tpu_custom_call.1} parent=5 // pred_region
        // Predicated region
        $region17: #{tpu_custom_call.1} parent=15 // pred_check
          %p169 = pneg %p60
        $region18: #{tpu_custom_call.1} parent=15 // pred_check_branch
          %171 = sbr.rel (%p169) target = $region20
        $region19: #{tpu_custom_call.1} parent=15 // pred_region
          %s172 = sand.u32 %s50, 1
          %s173 = scalar_lea.sflag [#allocation5], %s172
          %s174 = sand.u32 %s50, 1
          %s175 = smul.addr %s174, 16
          %s176 = scalar_lea.vmem [#allocation4], %s175
          %s177 = sadd.s32 %s29, %s30
          %p178 = scmp.lt.s32.totalorder %s177, 0
          %s179 = scalar_select %p178, %s177, 0
          %s180 = smul.u32 2, %s179
          %s182 = ssub.s32 256, 256
          %183 = vsyncadd %s173, %s182
          %s184 = smul.addr %s180, 64
          %s185 = scalar_lea.hbm %s0, %s184
          %s186 = sshll.u32 %s176, 4
          %s187 = int_to_ptr.vmem [resolvable:$true] %s186
          %192 = dma.hbm_to_vmem [thread:$0]  %s185, 256, %s187, %s173, 128, 128, 8
        $region20: #{tpu_custom_call.1} parent=15 // pred_fallthru
          _
        // Predicated region
        $region21: #{tpu_custom_call.1} parent=15 // pred_check
          %p193 = pneg %p92
        $region22: #{tpu_custom_call.1} parent=15 // pred_check_branch
          %195 = sbr.rel (%p193) target = $region24
        $region23: #{tpu_custom_call.1} parent=15 // pred_region
          %s196 = sand.u32 %s82, 1
          %s197 = scalar_lea.sflag [#allocation8], %s196
          %s198 = sand.u32 %s82, 1
          %s199 = smul.addr %s198, 4
          %s200 = scalar_lea.vmem [#allocation7], %s199
          %s201 = sadd.s32 %s29, %s30
          %p202 = scmp.lt.s32.totalorder %s201, 0
          %s203 = scalar_select %p202, %s201, 0
          %s204 = smul.u32 2, %s203
          %s206 = ssub.s32 64, 64
          %207 = vsyncadd %s197, %s206
          %s208 = smul.addr %s204, 32
          %s209 = scalar_lea.hbm %s1, %s208
          %s211 = sshll.u32 %s200, 4
          %s212 = int_to_ptr.vmem [resolvable:$true] %s211
          %214 = dma.hbm_to_vmem [thread:$0]  %s209, 64, %s212, %s197
        $region24: #{tpu_custom_call.1} parent=15 // pred_fallthru
          _
      $region16: #{tpu_custom_call.1} parent=5 // pred_fallthru
        _
      %p215 = scmp.le.s32.totalorder 1, %s22
      %p216 = scmp.lt.s32.totalorder %s22, 3
      %p217 = pnand %p215, %p216
      %p218 = pneg %p217
      // Predicated region
      $region25: #{tpu_custom_call.1} parent=5 // pred_check
        _
      $region26: #{tpu_custom_call.1} parent=5 // pred_check_branch
        %220 = sbr.rel (%p217) target = $region28
      $region27: #{tpu_custom_call.1} parent=5 // pred_region
        %s221 = ssub.s32 %s22, 1
        %s222 = sand.u32 %s53, 1
        %s223 = scalar_lea.sflag [#allocation5], %s222
        %s224 = sand.u32 %s53, 1
        %s225 = smul.addr %s224, 16
        %s226 = scalar_lea.vmem [#allocation4], %s225
        // Predicated region
        $region29: #{tpu_custom_call.1} parent=27 // pred_check
          %p227 = pneg %p66
        $region30: #{tpu_custom_call.1} parent=27 // pred_check_branch
          %229 = sbr.rel (%p227) target = $region32
        $region31: #{tpu_custom_call.1} parent=27 // pred_region
          %230 = dma.done %s223, 256
        $region32: #{tpu_custom_call.1} parent=27 // pred_fallthru
          _
        %s231 = sand.u32 %s85, 1
        %s232 = scalar_lea.sflag [#allocation8], %s231
        %s233 = sand.u32 %s85, 1
        %s234 = smul.addr %s233, 4
        %s235 = scalar_lea.vmem [#allocation7], %s234
        // Predicated region
        $region33: #{tpu_custom_call.1} parent=27 // pred_check
          %p236 = pneg %p98
        $region34: #{tpu_custom_call.1} parent=27 // pred_check_branch
          %238 = sbr.rel (%p236) target = $region36
        $region35: #{tpu_custom_call.1} parent=27 // pred_region
          %239 = dma.done %s232, 64
        $region36: #{tpu_custom_call.1} parent=27 // pred_fallthru
          _
        %s240 = sand.u32 %s53, 1
        %s241 = scalar_lea.sflag [#allocation5], %s240
        %s242 = sand.u32 %s53, 1
        %s243 = smul.addr %s242, 16
        %s244 = scalar_lea.vmem [#allocation4], %s243
        %p245 = pneg %p66
        %p246 = pneg %p63
        %s247 = sand.u32 %s85, 1
        %s248 = scalar_lea.sflag [#allocation8], %s247
        %s249 = sand.u32 %s85, 1
        %s250 = smul.addr %s249, 4
        %s251 = scalar_lea.vmem [#allocation7], %s250
        %p252 = pneg %p98
        %p253 = pneg %p95
        %p254 = pneg %p124
        %p255 = pneg %p121
        %s256 = sand.u32 %s111, 1
        %s257 = scalar_lea.sflag [#allocation6], %s256
        %s258 = sand.u32 %s111, 1
        %s259 = scalar_lea.vmem [#allocation9], %s258
        %p260 = pneg %p150
        %p261 = pneg %p147
        %s262 = sand.u32 %s137, 1
        %s263 = scalar_lea.sflag [#allocation11], %s262
        %s264 = sand.u32 %s137, 1
        %s265 = scalar_lea.vmem [#allocation10], %s264
        %s266 = sadd.s32 %s31, %s32
        %p267 = scmp.lt.s32.totalorder %s266, 0
        %s268 = scalar_select %p267, %s266, 0
        %s269 = smul.u32 2, %s268
        %s270 = sadd.s32 %s31, %s32
        %p271 = scmp.lt.s32.totalorder %s270, 0
        %s272 = scalar_select %p271, %s270, 0
        %s273 = smul.u32 2, %s272
        %p274 = scmp.eq.s32.totalorder %s32, 0
        // Predicated region
        $region37: #{tpu_custom_call.1} parent=27 // pred_check
          %p275 = pneg %p274
        $region38: #{tpu_custom_call.1} parent=27 // pred_check_branch
          %277 = sbr.rel (%p275) target = $region40
        $region39: #{tpu_custom_call.1} parent=27 // pred_region
          %278 = vst [vmem:[#allocation2] sm:$0xf] 0.0
          %279 = vst [vmem:[#allocation3] sm:$0xf] 0.0
        $region40: #{tpu_custom_call.1} parent=27 // pred_fallthru
          _
        %v280 = vld [vmem:[%s226] sm:$0xff]
        %v281 = vld [vmem:[%s226 + $0x8] sm:$0xff]
        %v282 = vld [vmem:[%s235] sm:$0xf]
        %v285 = vcombine.high %v280, %v280
        %v286 = vcombine.high %v281, %v281
        %vm289 = vcmask 1043456
        %v290 = vsel %vm289, %v280, -inf
        %v291 = vrot.slane %v290, 4
        %v292 = vmax.f32 %v290, %v291
        %v293 = vrot.slane %v292, 2
        %v294 = vmax.f32 %v292, %v293
        %v295 = vrot.slane %v294, 1
        %v296 = vmax.f32 %v294, %v295
        %v297 = vsel %vm289, %v285, -inf
        %v298 = vrot.slane %v297, 4
        %v299 = vmax.f32 %v297, %v298
        %v300 = vrot.slane %v299, 2
        %v301 = vmax.f32 %v299, %v300
        %v302 = vrot.slane %v301, 1
        %v303 = vmax.f32 %v301, %v302
        %v304 = vsel %vm289, %v281, -inf
        %v305 = vrot.slane %v304, 4
        %v306 = vmax.f32 %v304, %v305
        %v307 = vrot.slane %v306, 2
        %v308 = vmax.f32 %v306, %v307
        %v309 = vrot.slane %v308, 1
        %v310 = vmax.f32 %v308, %v309
        %v311 = vsel %vm289, %v286, -inf
        %v312 = vrot.slane %v311, 4
        %v313 = vmax.f32 %v311, %v312
        %v314 = vrot.slane %v313, 2
        %v315 = vmax.f32 %v313, %v314
        %v316 = vrot.slane %v315, 1
        %v317 = vmax.f32 %v315, %v316
        %v322 = vcombine.low %v296, %v303
        %v323 = vcombine.low %v310, %v317
        %v326 = vsub.f32 %v280, %v322
        %v327 = vsub.f32 %v281, %v323
        %v328 = vmul.f32 %v326, 1.442695
        %v329 = vpow.pop %v328
        %v330 = vmul.f32 %v327, 1.442695
        %v331 = vpow.pop %v330
        %v334 = vcombine.high %v329, %v329
        %v335 = vcombine.high %v331, %v331
        %v338 = vsel %vm289, %v329, 0.0
        %v339 = vrot.slane %v338, 4
        %v340 = vadd.f32 %v338, %v339
        %v341 = vrot.slane %v340, 2
        %v342 = vadd.f32 %v340, %v341
        %v343 = vrot.slane %v342, 1
        %v344 = vadd.f32 %v342, %v343
        %v345 = vsel %vm289, %v334, 0.0
        %v346 = vrot.slane %v345, 4
        %v347 = vadd.f32 %v345, %v346
        %v348 = vrot.slane %v347, 2
        %v349 = vadd.f32 %v347, %v348
        %v350 = vrot.slane %v349, 1
        %v351 = vadd.f32 %v349, %v350
        %v352 = vsel %vm289, %v331, 0.0
        %v353 = vrot.slane %v352, 4
        %v354 = vadd.f32 %v352, %v353
        %v355 = vrot.slane %v354, 2
        %v356 = vadd.f32 %v354, %v355
        %v357 = vrot.slane %v356, 1
        %v358 = vadd.f32 %v356, %v357
        %v359 = vsel %vm289, %v335, 0.0
        %v360 = vrot.slane %v359, 4
        %v361 = vadd.f32 %v359, %v360
        %v362 = vrot.slane %v361, 2
        %v363 = vadd.f32 %v361, %v362
        %v364 = vrot.slane %v363, 1
        %v365 = vadd.f32 %v363, %v364
        %v366 = vlog2.pop %v344
        %v367 = vmul.f32 %v366, 0.6931472
        %v368 = vlog2.pop %v351
        %v369 = vmul.f32 %v368, 0.6931472
        %v370 = vlog2.pop %v358
        %v371 = vmul.f32 %v370, 0.6931472
        %v372 = vlog2.pop %v365
        %v373 = vmul.f32 %v372, 0.6931472
        %v374 = vadd.f32 %v296, %v367
        %v375 = vadd.f32 %v303, %v369
        %v376 = vadd.f32 %v310, %v371
        %v377 = vadd.f32 %v317, %v373
        %v378 = vlaneseq
        %v379 = vshrl.u32 %v378, 7
        %v381 = vunpack.c.l.s4 1966171168
        %v382 = vunpack.c.0.s8 %v381
        %v383 = vlaneseq
        %v384 = vshrl.u32 %v383, 7
        %v385 = vsub.s32 %v382, %v384
        %v386 = vrot.slane %v282, %v385
        %v387 = vcombine.high %v386, %v386
        %v388 = vlaneseq
        %v389 = vshrl.u32 %v388, 7
        %v390 = vsub.s32 0, %v389
        %v391 = vrot.slane %v386, %v390
        %v392 = vlaneseq
        %v393 = vshrl.u32 %v392, 7
        %v394 = vsub.s32 1, %v393
        %v395 = vrot.slane %v386, %v394
        %v396 = vlaneseq
        %v397 = vshrl.u32 %v396, 7
        %v398 = vsub.s32 0, %v397
        %v399 = vrot.slane %v387, %v398
        %v400 = vlaneseq
        %v401 = vshrl.u32 %v400, 7
        %v402 = vsub.s32 1, %v401
        %v403 = vrot.slane %v387, %v402
        %vm404 = vcmp.eq.s32.totalorder %v379, %v391
        %vm405 = vcmp.eq.s32.totalorder %v379, %v395
        %vm406 = vcmp.eq.s32.totalorder %v379, %v399
        %vm407 = vcmp.eq.s32.totalorder %v379, %v403
        %v408 = vsel %vm404, %v280, 0.0
        %v409 = vsel %vm405, %v285, 0.0
        %v410 = vsel %vm406, %v281, 0.0
        %v411 = vsel %vm407, %v286, 0.0
        %v412 = vsel %vm289, %v408, 0.0
        %v413 = vrot.slane %v412, 4
        %v414 = vadd.f32 %v412, %v413
        %v415 = vrot.slane %v414, 2
        %v416 = vadd.f32 %v414, %v415
        %v417 = vrot.slane %v416, 1
        %v418 = vadd.f32 %v416, %v417
        %v419 = vsel %vm289, %v409, 0.0
        %v420 = vrot.slane %v419, 4
        %v421 = vadd.f32 %v419, %v420
        %v422 = vrot.slane %v421, 2
        %v423 = vadd.f32 %v421, %v422
        %v424 = vrot.slane %v423, 1
        %v425 = vadd.f32 %v423, %v424
        %v426 = vsel %vm289, %v410, 0.0
        %v427 = vrot.slane %v426, 4
        %v428 = vadd.f32 %v426, %v427
        %v429 = vrot.slane %v428, 2
        %v430 = vadd.f32 %v428, %v429
        %v431 = vrot.slane %v430, 1
        %v432 = vadd.f32 %v430, %v431
        %v433 = vsel %vm289, %v411, 0.0
        %v434 = vrot.slane %v433, 4
        %v435 = vadd.f32 %v433, %v434
        %v436 = vrot.slane %v435, 2
        %v437 = vadd.f32 %v435, %v436
        %v438 = vrot.slane %v437, 1
        %v439 = vadd.f32 %v437, %v438
        %s440 = sadd.s32 %s31, %s32
        %v441 = vlaneseq
        %v442 = vand.u32 %v441, 127
        %v443 = vadd.s32 %v442, 128
        %s444 = smul.u32 %s440, 256
        %v445 = vstv %s444
        %v446 = vadd.s32 %v445, %v442
        %v447 = vadd.s32 %v445, %v443
        %vm448 = vcmp.lt.s32.totalorder %v446, 256
        %vm449 = vcmp.lt.s32.totalorder %v447, 256
        %vm450 = vcmp.ne.s32.totalorder %v282, 4294967295
        %v451 = vsel %vm448, 1, 0
        %v452 = vsel %vm449, 1, 0
        %v453 = vcombine.low %v451, %v452
        %v455 = vunpack.c.l.s4 1983009808
        %v456 = vunpack.c.0.s8 %v455
        %v457 = vlaneseq
        %v458 = vshrl.u32 %v457, 7
        %v459 = vsub.s32 %v456, %v458
        %v460 = vrot.slane %v453, %v459
        %vm461 = vcmp.ne.s32.totalorder %v460, 0
        %vm462 = vmand %vm450, %vm461
        %v463 = vld [vmem:[#allocation2] sm:$0xf]
        %v464 = vsub.f32 %v374, %v418
        %v465 = vsub.f32 %v375, %v425
        %v466 = vsub.f32 %v376, %v432
        %v467 = vsub.f32 %v377, %v439
        %v472 = vcombine.low %v464, %v465
        %v474 = vunpack.c.l.s4 1983009808
        %v475 = vunpack.c.0.s8 %v474
        %v476 = vlaneseq
        %v477 = vshrl.u32 %v476, 7
        %v478 = vsub.s32 %v475, %v477
        %v479 = vrot.slane %v472, %v478
        %v480 = vcombine.low %v466, %v467
        %v482 = vunpack.c.l.s4 1983009808
        %v483 = vunpack.c.0.s8 %v482
        %v484 = vlaneseq
        %v485 = vshrl.u32 %v484, 7
        %v486 = vsub.s32 %v483, %v485
        %v487 = vrot.slane %v480, %v486
        %vm488 = vcmask 1044484
        %v489 = vsel %vm488, %v479, %v479
        %vm490 = vcmask 1046534
        %v491 = vsel %vm490, %v479, %v489
        %v492 = vrot.slane %v487, 7
        %vm493 = vcmask 1041409
        %v494 = vsel %vm493, %v492, %v491
        %vm495 = vcmask 1043459
        %v496 = vsel %vm495, %v492, %v494
        %vm497 = vcmask 1045509
        %v498 = vsel %vm497, %v492, %v496
        %vm499 = vcmask 1047559
        %v500 = vsel %vm499, %v492, %v498
        %v502 = vsel %vm462, %v500, 0.0
        %v503 = vadd.f32 %v463, %v502
        %504 = vst [vmem:[#allocation2] sm:$0xf] %v503
        %v505 = vld [vmem:[#allocation3] sm:$0xf]
        %v506 = vsel %vm462, 1, 0
        %v507 = vcvt.s32.f32 %v506
        %v508 = vadd.f32 %v505, %v507
        %509 = vst [vmem:[#allocation3] sm:$0xf] %v508
        // Predicated region
        $region41: #{tpu_custom_call.1} parent=27 // pred_check
          %p510 = pneg %p274
        $region42: #{tpu_custom_call.1} parent=27 // pred_check_branch
          %512 = sbr.rel (%p510) target = $region44
        $region43: #{tpu_custom_call.1} parent=27 // pred_region
          %v513 = vld [vmem:[#allocation2] sm:$0xf]
          %v516 = vunpack.c.l.s4 1983009808
          %v517 = vunpack.c.0.s8 %v516
          %v518 = vlaneseq
          %v519 = vshrl.u32 %v518, 7
          %v520 = vsub.s32 %v517, %v519
          %v521 = vrot.slane %v513, %v520
          %v522 = vcombine.high %v521, %v521
          %vm525 = vcmask 1041408
          %v526 = vsel %vm525, %v521, 0.0
          %v527 = vsel %vm525, %v522, 0.0
          %v528 = vadd.f32 %v526, %v527
          %529 = vadd.xlane.f32.xlu0 %v528
          %v530 = vpop.xlane.xlu0 %529
          %v531 = vrot.slane %v530, 4
          %v532 = vadd.f32 %v530, %v531
          %v533 = vrot.slane %v532, 2
          %v534 = vadd.f32 %v532, %v533
          %v535 = vrot.slane %v534, 1
          %v536 = vadd.f32 %v534, %v535
          %s537 = vtos %v536
          %v538 = vstv %s537
          %539 = vst [vmem:[%s259] sm:$0x1] %v538
          %v540 = vld [vmem:[#allocation3] sm:$0xf]
          %v543 = vunpack.c.l.s4 1983009808
          %v544 = vunpack.c.0.s8 %v543
          %v545 = vlaneseq
          %v546 = vshrl.u32 %v545, 7
          %v547 = vsub.s32 %v544, %v546
          %v548 = vrot.slane %v540, %v547
          %v549 = vcombine.high %v548, %v548
          %v552 = vsel %vm525, %v548, 0.0
          %v553 = vsel %vm525, %v549, 0.0
          %v554 = vadd.f32 %v552, %v553
          %555 = vadd.xlane.f32.xlu0 %v554
          %v556 = vpop.xlane.xlu0 %555
          %v557 = vrot.slane %v556, 4
          %v558 = vadd.f32 %v556, %v557
          %v559 = vrot.slane %v558, 2
          %v560 = vadd.f32 %v558, %v559
          %v561 = vrot.slane %v560, 1
          %v562 = vadd.f32 %v560, %v561
          %s563 = vtos %v562
          %v564 = vstv %s563
          %565 = vst [vmem:[%s265] sm:$0x1] %v564
        $region44: #{tpu_custom_call.1} parent=27 // pred_fallthru
          _
        %s566 = sand.u32 %s111, 1
        %s567 = scalar_lea.sflag [#allocation6], %s566
        %s568 = sand.u32 %s111, 1
        %s569 = scalar_lea.vmem [#allocation9], %s568
        %s570 = sand.u32 %s137, 1
        %s571 = scalar_lea.sflag [#allocation11], %s570
        %s572 = sand.u32 %s137, 1
        %s573 = scalar_lea.vmem [#allocation10], %s572
        // Predicated region
        $region45: #{tpu_custom_call.1} parent=27 // pred_check
          %p574 = pneg %p121
        $region46: #{tpu_custom_call.1} parent=27 // pred_check_branch
          %576 = sbr.rel (%p574) target = $region48
        $region47: #{tpu_custom_call.1} parent=27 // pred_region
          %s578 = ssub.s32 16, 16
          %579 = vsyncadd %s567, %s578
          %s580 = smul.addr %s31, 16
          %s581 = scalar_lea.hbm %s2, %s580
          %s583 = sshll.u32 %s569, 4
          %s584 = int_to_ptr.vmem [resolvable:$true] %s583
          %586 = dma.vmem_to_hbm [thread:$0]  %s584, 16, %s581, %s567
        $region48: #{tpu_custom_call.1} parent=27 // pred_fallthru
          _
        // Predicated region
        $region49: #{tpu_custom_call.1} parent=27 // pred_check
          %p587 = pneg %p147
        $region50: #{tpu_custom_call.1} parent=27 // pred_check_branch
          %589 = sbr.rel (%p587) target = $region52
        $region51: #{tpu_custom_call.1} parent=27 // pred_region
          %s591 = ssub.s32 16, 16
          %592 = vsyncadd %s571, %s591
          %s593 = smul.addr %s31, 16
          %s594 = scalar_lea.hbm %s3, %s593
          %s596 = sshll.u32 %s573, 4
          %s597 = int_to_ptr.vmem [resolvable:$true] %s596
          %599 = dma.vmem_to_hbm [thread:$0]  %s597, 16, %s594, %s571
        $region52: #{tpu_custom_call.1} parent=27 // pred_fallthru
          _
      $region28: #{tpu_custom_call.1} parent=5 // pred_fallthru
        _
      %p600 = scmp.le.s32.totalorder 2, %s22
      // Predicated region
      $region53: #{tpu_custom_call.1} parent=5 // pred_check
        %p601 = pneg %p600
      $region54: #{tpu_custom_call.1} parent=5 // pred_check_branch
        %603 = sbr.rel (%p601) target = $region56
      $region55: #{tpu_custom_call.1} parent=5 // pred_region
        %s604 = ssub.s32 %s22, 2
        // Predicated region
        $region57: #{tpu_custom_call.1} parent=55 // pred_check
          %p605 = pneg %p127
        $region58: #{tpu_custom_call.1} parent=55 // pred_check_branch
          %607 = sbr.rel (%p605) target = $region60
        $region59: #{tpu_custom_call.1} parent=55 // pred_region
          %s608 = sand.u32 %s112, 1
          %s609 = scalar_lea.sflag [#allocation6], %s608
          %s610 = sand.u32 %s112, 1
          %s611 = scalar_lea.vmem [#allocation9], %s610
          %612 = dma.done %s609, 16
        $region60: #{tpu_custom_call.1} parent=55 // pred_fallthru
          _
        // Predicated region
        $region61: #{tpu_custom_call.1} parent=55 // pred_check
          %p613 = pneg %p153
        $region62: #{tpu_custom_call.1} parent=55 // pred_check_branch
          %615 = sbr.rel (%p613) target = $region64
        $region63: #{tpu_custom_call.1} parent=55 // pred_region
          %s616 = sand.u32 %s138, 1
          %s617 = scalar_lea.sflag [#allocation11], %s616
          %s618 = sand.u32 %s138, 1
          %s619 = scalar_lea.vmem [#allocation10], %s618
          %620 = dma.done %s617, 16
        $region64: #{tpu_custom_call.1} parent=55 // pred_fallthru
          _
      $region56: #{tpu_custom_call.1} parent=5 // pred_fallthru
        _
    $region6: #{tpu_custom_call.1} parent=1 // loop_footer
      %s26 = sadd.s32 1, %s22
    $region7: #{tpu_custom_call.1} parent=1 // loop_footer_branch
      %21 = sbr.rel target = $region3
    $region8: #{tpu_custom_call.1} parent=1 // loop_exit
      _
    %621 = vsyncpa [#allocation5], 1
    %s622 = scalar_lea.sflag [#allocation5], 1
    %623 = vsyncpa %s622, 1
    %624 = vsyncpa [#allocation8], 1
    %s625 = scalar_lea.sflag [#allocation8], 1
    %626 = vsyncpa %s625, 1
    %627 = vsyncpa [#allocation6], 1
    %s628 = scalar_lea.sflag [#allocation6], 1
    %629 = vsyncpa %s628, 1
    %630 = vsyncpa [#allocation11], 1
    %s631 = scalar_lea.sflag [#allocation11], 1
    %632 = vsyncpa %s631, 1

</llo_original>
